<compile_context>
chip_gen: v5e
topology: v5e:2x2
jax: 0.10.0
libtpu: 0.0.40
codegen_flags: <defaults>
</compile_context>

<pallas_src>
import jax
import jax.numpy as jnp
from jax.experimental import pallas as pl
from jax.experimental.pallas import tpu as pltpu

LN_EPS = 1e-5  # torch.nn.LayerNorm default


def _round_up(x, m):
    return ((x + m - 1) // m) * m


def vann_kernel(x_ref, w_ref, p_ref, o_ref):
    # Linear: y = x @ W  (MXU, bf16 inputs, f32 accumulation)
    y = jnp.dot(x_ref[...], w_ref[...], preferred_element_type=jnp.float32)
    # + bias (params row 0), f32
    y = y + p_ref[0:1, :]

    # LayerNorm over the last dim (biased variance, like torch.nn.LayerNorm) — f32 math.
    mean = jnp.mean(y, axis=-1, keepdims=True)
    centered = y - mean
    var = jnp.mean(centered * centered, axis=-1, keepdims=True)
    y = centered * jax.lax.rsqrt(var + LN_EPS)
    y = y * p_ref[1:2, :] + p_ref[2:3, :]   # gamma, beta

    # Activation: ReLU.  Dropout: eval mode -> identity.
    y = jnp.maximum(y, 0.0)
    o_ref[...] = y.astype(o_ref.dtype)


def vann_custom_layer(x, w, b, gamma, beta, *, block_batch=512,
                      compute_dtype=jnp.bfloat16):
    """Fused Linear + LayerNorm + ReLU (+ eval-mode dropout) forward."""
    batch, inner = x.shape
    inner_w, outter = w.shape
    assert inner == inner_w
    out_dtype = x.dtype

    # Fused parameter block: row 0 = bias, row 1 = gamma, row 2 = beta (kept f32).
    params = jnp.stack([b, gamma, beta]).astype(jnp.float32)   # (3, outter)

    # bf16 MXU operands (f32 accumulation inside the kernel).
    x_c = x.astype(compute_dtype)
    w_c = w.astype(compute_dtype)

    # Batch tile: multiple of 8 sublanes, clamped to the (padded) batch.
    tb = min(block_batch, _round_up(batch, 8))
    tb = _round_up(tb, 8)
    b_pad = _round_up(batch, tb)
    if b_pad != batch:
        x_c = jnp.pad(x_c, ((0, b_pad - batch), (0, 0)))
    grid = (b_pad // tb,)

    cost = pl.CostEstimate(
        flops=2 * b_pad * inner * outter,
        transcendentals=b_pad,  # one rsqrt per row
        bytes_accessed=(x_c.size * x_c.dtype.itemsize
                        + w_c.size * w_c.dtype.itemsize
                        + params.size * params.dtype.itemsize
                        + b_pad * outter * jnp.dtype(out_dtype).itemsize),
    )

    out = pl.pallas_call(
        vann_kernel,
        out_shape=jax.ShapeDtypeStruct((b_pad, outter), out_dtype),
        grid_spec=pltpu.PrefetchScalarGridSpec(
            num_scalar_prefetch=0,
            grid=grid,
            in_specs=[
                pl.BlockSpec((tb, inner), lambda i: (i, 0)),      # streamed activations
                pl.BlockSpec((inner, outter), lambda i: (0, 0)),  # resident weights
                pl.BlockSpec((3, outter), lambda i: (0, 0)),      # resident b/gamma/beta
            ],
            out_specs=pl.BlockSpec((tb, outter), lambda i: (i, 0)),
        ),
        compiler_params=pltpu.CompilerParams(
            dimension_semantics=("parallel",),
        ),
        cost_estimate=cost,
    )(x_c, w_c, params)

    if b_pad != batch:
        out = out[:batch]
    return out


def _reference(x, w, b, gamma, beta, compute_dtype=jnp.bfloat16):
    # Mirror the kernel's bf16 quantization of the matmul operands, f32 math after.
    xq = x.astype(compute_dtype).astype(jnp.float32)
    wq = w.astype(compute_dtype).astype(jnp.float32)
    y = xq @ wq + b
    mean = jnp.mean(y, axis=-1, keepdims=True)
    var = jnp.mean((y - mean) ** 2, axis=-1, keepdims=True)
    y = (y - mean) / jnp.sqrt(var + LN_EPS)
    y = y * gamma + beta
    return jnp.maximum(y, 0.0)


if __name__ == "__main__":
    innerSize, outterSize, batch = 32, 64, 16

    key = jax.random.PRNGKey(0)
    kx, kw, kb = jax.random.split(key, 3)

    # Deterministic parameter init, mirroring torch.nn.Linear's U(-1/sqrt(in), 1/sqrt(in)).
    bound = 1.0 / (innerSize ** 0.5)
    w = jax.random.uniform(kw, (innerSize, outterSize), jnp.float32, -bound, bound)
    b = jax.random.uniform(kb, (outterSize,), jnp.float32, -bound, bound)
    gamma = jnp.ones((outterSize,), jnp.float32)   # LayerNorm weight
    beta = jnp.zeros((outterSize,), jnp.float32)   # LayerNorm bias

    x = jax.random.normal(kx, (batch, innerSize), jnp.float32)

    # block_batch=8 so the small demo exercises a multi-step grid (16/8 = 2 tiles)
    # with the weight block staying resident across steps.
    out = vann_custom_layer(x, w, b, gamma, beta, block_batch=8)
    out = jax.block_until_ready(out)

    ref = _reference(x, w, b, gamma, beta)
    assert out.shape == (batch, outterSize)
    assert jnp.allclose(out, ref, atol=1e-4, rtol=1e-4), "mismatch vs reference"

    print("KERNEL_OK")
</pallas_src>

<mosaic_0001>
module attributes {stable_mosaic.version = 11 : i64} {
  func.func @vann_kernel(%arg0: i32, %arg1: memref<8x32xbf16, #tpu.memory_space<vmem>>, %arg2: memref<32x64xbf16, #tpu.memory_space<vmem>>, %arg3: memref<3x64xf32, #tpu.memory_space<vmem>>, %arg4: memref<8x64xf32, #tpu.memory_space<vmem>>) attributes {dimension_semantics = [#tpu.dimension_semantics<parallel>], iteration_bounds = array<i64: 2>, scalar_prefetch = 0 : i64, scratch_operands = 0 : i64, tpu.core_type = #tpu.core_type<tc>, window_params = [{transform_indices = @transform_0, window_bounds = array<i64: 8, 32>}, {pipeline_mode = #tpu.pipeline_mode<synchronous>, transform_indices = @transform_1, window_bounds = array<i64: 32, 64>}, {pipeline_mode = #tpu.pipeline_mode<synchronous>, transform_indices = @transform_2, window_bounds = array<i64: 3, 64>}, {transform_indices = @transform_3, window_bounds = array<i64: 8, 64>}]} {
    %c0 = arith.constant 0 : index
    %c0_0 = arith.constant 0 : index
    %0 = vector.load %arg1[%c0, %c0_0] : memref<8x32xbf16, #tpu.memory_space<vmem>>, vector<8x32xbf16>
    %c0_1 = arith.constant 0 : index
    %c0_2 = arith.constant 0 : index
    %1 = vector.load %arg2[%c0_1, %c0_2] : memref<32x64xbf16, #tpu.memory_space<vmem>>, vector<32x64xbf16>
    %cst = arith.constant dense<0.000000e+00> : vector<8x64xf32>
    %2 = tpu.matmul %0, %1, %cst {dimension_numbers = #tpu.dot_dimension_numbers<[1], [0], [0], [1], [0, 0, 1, 1], [], []>} : vector<8x32xbf16>, vector<32x64xbf16>, vector<8x64xf32> -> vector<8x64xf32>
    %c0_3 = arith.constant 0 : index
    %c0_4 = arith.constant 0 : index
    %3 = vector.load %arg3[%c0_3, %c0_4] : memref<3x64xf32, #tpu.memory_space<vmem>>, vector<1x64xf32>
    %4 = vector.broadcast %3 : vector<1x64xf32> to vector<8x64xf32>
    %5 = arith.addf %2, %4 : vector<8x64xf32>
    %cst_5 = arith.constant dense<0.000000e+00> : vector<8xf32>
    %6 = vector.multi_reduction <add>, %5, %cst_5 [1] : vector<8x64xf32> to vector<8xf32>
    %7 = vector.shape_cast %6 : vector<8xf32> to vector<8x1xf32>
    %cst_6 = arith.constant 6.400000e+01 : f32
    %8 = vector.broadcast %cst_6 : f32 to vector<8x1xf32>
    %9 = arith.divf %7, %8 : vector<8x1xf32>
    %10 = vector.broadcast %9 : vector<8x1xf32> to vector<8x64xf32>
    %11 = arith.subf %5, %10 : vector<8x64xf32>
    %12 = arith.mulf %11, %11 : vector<8x64xf32>
    %cst_7 = arith.constant dense<0.000000e+00> : vector<8xf32>
    %13 = vector.multi_reduction <add>, %12, %cst_7 [1] : vector<8x64xf32> to vector<8xf32>
    %14 = vector.shape_cast %13 : vector<8xf32> to vector<8x1xf32>
    %cst_8 = arith.constant 6.400000e+01 : f32
    %15 = vector.broadcast %cst_8 : f32 to vector<8x1xf32>
    %16 = arith.divf %14, %15 : vector<8x1xf32>
    %cst_9 = arith.constant 9.99999974E-6 : f32
    %17 = vector.broadcast %cst_9 : f32 to vector<8x1xf32>
    %18 = arith.addf %16, %17 : vector<8x1xf32>
    %19 = math.rsqrt %18 : vector<8x1xf32>
    %20 = vector.broadcast %19 : vector<8x1xf32> to vector<8x64xf32>
    %21 = arith.mulf %11, %20 : vector<8x64xf32>
    %c1 = arith.constant 1 : index
    %c0_10 = arith.constant 0 : index
    %22 = vector.load %arg3[%c1, %c0_10] : memref<3x64xf32, #tpu.memory_space<vmem>>, vector<1x64xf32>
    %23 = vector.broadcast %22 : vector<1x64xf32> to vector<8x64xf32>
    %24 = arith.mulf %21, %23 : vector<8x64xf32>
    %c2 = arith.constant 2 : index
    %c0_11 = arith.constant 0 : index
    %25 = vector.load %arg3[%c2, %c0_11] : memref<3x64xf32, #tpu.memory_space<vmem>>, vector<1x64xf32>
    %26 = vector.broadcast %25 : vector<1x64xf32> to vector<8x64xf32>
    %27 = arith.addf %24, %26 : vector<8x64xf32>
    %cst_12 = arith.constant 0.000000e+00 : f32
    %28 = vector.broadcast %cst_12 : f32 to vector<8x64xf32>
    %29 = arith.maximumf %27, %28 : vector<8x64xf32>
    %c0_13 = arith.constant 0 : index
    %c0_14 = arith.constant 0 : index
    %30 = vector.load %arg4[%c0_13, %c0_14] : memref<8x64xf32, #tpu.memory_space<vmem>>, vector<8x64xf32>
    tpu.vector_store %arg4[%c0_13, %c0_14], %29 {strides = array<i32>} : memref<8x64xf32, #tpu.memory_space<vmem>>, vector<8x64xf32>,
    return
  }
  func.func @transform_0(%arg0: i32) -> (i32, i32) {
    %c0_i32 = arith.constant 0 : i32
    %c0_i32_0 = arith.constant 0 : i32
    return %arg0, %c0_i32 : i32, i32
  }
  func.func @transform_1(%arg0: i32) -> (i32, i32) {
    %c0_i32 = arith.constant 0 : i32
    %c0_i32_0 = arith.constant 0 : i32
    %c0_i32_1 = arith.constant 0 : i32
    return %c0_i32, %c0_i32_0 : i32, i32
  }
  func.func @transform_2(%arg0: i32) -> (i32, i32) {
    %c0_i32 = arith.constant 0 : i32
    %c0_i32_0 = arith.constant 0 : i32
    %c0_i32_1 = arith.constant 0 : i32
    return %c0_i32, %c0_i32_0 : i32, i32
  }
  func.func @transform_3(%arg0: i32) -> (i32, i32) {
    %c0_i32 = arith.constant 0 : i32
    %c0_i32_0 = arith.constant 0 : i32
    return %arg0, %c0_i32 : i32, i32
  }
}

</mosaic_0001>

<llo_original>
// kernel: tpu_custom_call.1
$region0: #{tpu_custom_call.1}
  #allocation0 [shape = 'u32[]', space=smem, size = 0x4, offset = 0x4, fixed_abs, tag = 'smem constant byte address 0x4 - core index']
  #allocation1 [shape = 'u32[72,128]{1,0:T(1,128)}', space=vmem, size = 0x9000, scoped, tag = 'internal scratch']
  %s0 = inlined_call_operand.hbm [shape: bf16[16,32], index: 0, kind: input, shape index: {}]
  %s1 = inlined_call_operand.hbm [shape: bf16[32,64], index: 1, kind: input, shape index: {}]
  %s2 = inlined_call_operand.hbm [shape: f32[3,64], index: 2, kind: input, shape index: {}]
  %s3 = inlined_call_operand.hbm [shape: f32[16,64], index: 3, kind: output, shape index: {}]
  %s4 = sld [smem:[#allocation0]]
  $region57: #{tpu_custom_call.1} parent=0
    _
  %s6 = ssub.s32 1, %s4
  %s7 = scalar_select 0, %s6, %s4
  $region1: #{tpu_custom_call.1} parent=0
    #allocation2 [shape = 'u8[4096]{0}', space=vmem, size = 0x1000, scoped, tag = 'input window, operand 0']
    #allocation3 [shape = 's32[2]{0}', space=sflag, size = 0x8, scoped, tag = 'scoped memory for tpu_custom_call.1']
    #allocation4 [shape = 's32[2]{0}', space=sflag, size = 0x8, scoped, tag = 'scoped memory for tpu_custom_call.1']
    #allocation5 [shape = 'u8[8192]{0}', space=vmem, size = 0x2000, scoped, tag = 'input window, operand 1, single buffered']
    #allocation6 [shape = 's32[1]{0}', space=sflag, size = 0x4, scoped, tag = 'scoped memory for tpu_custom_call.1']
    #allocation7 [shape = 'u8[2048]{0}', space=vmem, size = 0x800, scoped, tag = 'input window, operand 2, single buffered']
    #allocation8 [shape = 'u8[8192]{0}', space=vmem, size = 0x2000, scoped, tag = 'output window, operand 0']
    %8 = vsyncpa [#allocation3], 0
    %s9 = scalar_lea.sflag [#allocation3], 1
    %10 = vsyncpa %s9, 0
    %11 = vsyncpa [#allocation6], 0
    %12 = vsyncpa [#allocation4], 0
    %s13 = scalar_lea.sflag [#allocation4], 1
    %14 = vsyncpa %s13, 0
    loop: start=0, step=1, limit=4
    $region2: #{tpu_custom_call.1} parent=1 // loop_pre_header
      _
    $region3: #{tpu_custom_call.1} parent=1 // loop_header
      %s16 = sphi 0, %s20
      %p17 = scmp.ge.s32.totalorder %s16, 4
      %s26 = sphi 0, %s28
      %s29 = sphi 0, %s26
      %s30 = sphi 0, %s29
      %s46 = sphi 0, %s30
      %s50 = sphi 0, %s50
      %s52 = sphi 0, %s50
      %s53 = sphi 0, %s52
      %s67 = sphi 0, %s53
      %s71 = sphi 0, %s71
      %s73 = sphi 0, %s71
      %s74 = sphi 0, %s73
      %s88 = sphi 0, %s74
      %s94 = sphi 0, %s96
      %s97 = sphi 0, %s94
      %s98 = sphi 0, %s97
      %s114 = sphi 0, %s98
    $region4: #{tpu_custom_call.1} parent=1 // loop_header_branch
      %19 = sbr.rel (%p17) target = $region8
    $region5: #{tpu_custom_call.1} parent=1 // loop_body
      %s21 = ssub.s32 %s16, 1
      %s22 = ssub.s32 %s16, 2
      %s23 = sadd.s32 %s16, 1
      %s24 = ssub.s32 %s16, %s23
      %p25 = scmp.eq.s32.totalorder %s24, 0
      %s27 = sadd.s32 %s26, 1
      %s28 = scalar_select %p25, %s26, %s27
      %p31 = pneg %p25
      %p32 = scmp.eq.s32.totalorder %s16, 1
      %p33 = por %p31, %p32
      %p34 = scmp.ne.s32.totalorder %s26, %s29
      %p35 = scmp.eq.s32.totalorder %s16, 0
      %p36 = por %p34, %p35
      %p37 = scmp.ne.s32.totalorder %s26, %s29
      %p38 = scmp.eq.s32.totalorder %s21, 1
      %p39 = por %p37, %p38
      %p40 = scmp.ne.s32.totalorder %s29, %s30
      %p41 = scmp.eq.s32.totalorder %s21, 0
      %p42 = por %p40, %p41
      %p43 = scmp.ne.s32.totalorder %s29, %s30
      %p44 = scmp.eq.s32.totalorder %s22, 1
      %p45 = por %p43, %p44
      %p47 = scmp.ne.s32.totalorder %s30, %s46
      %p48 = scmp.eq.s32.totalorder %s22, 0
      %p49 = por %p47, %p48
      %s51 = sadd.s32 %s50, 1
      %p54 = scmp.eq.s32.totalorder %s16, 1
      %p55 = scmp.ne.s32.totalorder %s50, %s52
      %p56 = scmp.eq.s32.totalorder %s16, 0
      %p57 = por %p55, %p56
      %p58 = scmp.ne.s32.totalorder %s50, %s52
      %p59 = scmp.eq.s32.totalorder %s21, 1
      %p60 = por %p58, %p59
      %p61 = scmp.ne.s32.totalorder %s52, %s53
      %p62 = scmp.eq.s32.totalorder %s21, 0
      %p63 = por %p61, %p62
      %p64 = scmp.ne.s32.totalorder %s52, %s53
      %p65 = scmp.eq.s32.totalorder %s22, 1
      %p66 = por %p64, %p65
      %p68 = scmp.ne.s32.totalorder %s53, %s67
      %p69 = scmp.eq.s32.totalorder %s22, 0
      %p70 = por %p68, %p69
      %s72 = sadd.s32 %s71, 1
      %p75 = scmp.eq.s32.totalorder %s16, 1
      %p76 = scmp.ne.s32.totalorder %s71, %s73
      %p77 = scmp.eq.s32.totalorder %s16, 0
      %p78 = por %p76, %p77
      %p79 = scmp.ne.s32.totalorder %s71, %s73
      %p80 = scmp.eq.s32.totalorder %s21, 1
      %p81 = por %p79, %p80
      %p82 = scmp.ne.s32.totalorder %s73, %s74
      %p83 = scmp.eq.s32.totalorder %s21, 0
      %p84 = por %p82, %p83
      %p85 = scmp.ne.s32.totalorder %s73, %s74
      %p86 = scmp.eq.s32.totalorder %s22, 1
      %p87 = por %p85, %p86
      %p89 = scmp.ne.s32.totalorder %s74, %s88
      %p90 = scmp.eq.s32.totalorder %s22, 0
      %p91 = por %p89, %p90
      %s92 = ssub.s32 %s16, %s23
      %p93 = scmp.eq.s32.totalorder %s92, 0
      %s95 = sadd.s32 %s94, 1
      %s96 = scalar_select %p93, %s94, %s95
      %p99 = pneg %p93
      %p100 = scmp.eq.s32.totalorder %s16, 1
      %p101 = por %p99, %p100
      %p102 = scmp.ne.s32.totalorder %s94, %s97
      %p103 = scmp.eq.s32.totalorder %s16, 0
      %p104 = por %p102, %p103
      %p105 = scmp.ne.s32.totalorder %s94, %s97
      %p106 = scmp.eq.s32.totalorder %s21, 1
      %p107 = por %p105, %p106
      %p108 = scmp.ne.s32.totalorder %s97, %s98
      %p109 = scmp.eq.s32.totalorder %s21, 0
      %p110 = por %p108, %p109
      %p111 = scmp.ne.s32.totalorder %s97, %s98
      %p112 = scmp.eq.s32.totalorder %s22, 1
      %p113 = por %p111, %p112
      %p115 = scmp.ne.s32.totalorder %s98, %s114
      %p116 = scmp.eq.s32.totalorder %s22, 0
      %p117 = por %p115, %p116
      %p118 = scmp.le.s32.totalorder 1, %s16
      %p119 = scmp.lt.s32.totalorder %s16, 3
      %p120 = pnand %p118, %p119
      %p121 = pneg %p120
      // Predicated region
      $region9: #{tpu_custom_call.1} parent=5 // pred_check
        _
      $region10: #{tpu_custom_call.1} parent=5 // pred_check_branch
        %123 = sbr.rel (%p120) target = $region12
      $region11: #{tpu_custom_call.1} parent=5 // pred_region
        %s124 = ssub.s32 %s16, 1
        // Predicated region
        $region13: #{tpu_custom_call.1} parent=11 // pred_check
          %p125 = pneg %p63
        $region14: #{tpu_custom_call.1} parent=11 // pred_check_branch
          %127 = sbr.rel (%p125) target = $region16
        $region15: #{tpu_custom_call.1} parent=11 // pred_region
          %129 = vsyncadd [#allocation6], 0
          %s130 = sshll.u32 %s1, 4
          %s131 = int_to_ptr.hbm [resolvable:$true] %s130
          %s132 = sshll.u32 [#allocation5], 4
          %s133 = int_to_ptr.vmem [resolvable:$true] %s132
          %138 = dma.hbm_to_vmem [thread:$0]  %s131, 256, %s133, [#allocation6], 64, 64, 4
        $region16: #{tpu_custom_call.1} parent=11 // pred_fallthru
          _
        // Predicated region
        $region17: #{tpu_custom_call.1} parent=11 // pred_check
          %p139 = pneg %p84
        $region18: #{tpu_custom_call.1} parent=11 // pred_check_branch
          %141 = sbr.rel (%p139) target = $region20
        $region19: #{tpu_custom_call.1} parent=11 // pred_region
          %143 = vsyncadd [#allocation6], 0
          %s145 = sshll.u32 %s2, 4
          %s146 = int_to_ptr.hbm [resolvable:$true] %s145
          %s147 = sshll.u32 [#allocation7], 4
          %s148 = int_to_ptr.vmem [resolvable:$true] %s147
          %150 = dma.hbm_to_vmem [thread:$0]  %s146, 64, %s148, [#allocation6]
        $region20: #{tpu_custom_call.1} parent=11 // pred_fallthru
          _
      $region12: #{tpu_custom_call.1} parent=5 // pred_fallthru
        _
      %p151 = scmp.lt.s32.totalorder %s16, 2
      // Predicated region
      $region21: #{tpu_custom_call.1} parent=5 // pred_check
        %p152 = pneg %p151
      $region22: #{tpu_custom_call.1} parent=5 // pred_check_branch
        %154 = sbr.rel (%p152) target = $region24
      $region23: #{tpu_custom_call.1} parent=5 // pred_region
        // Predicated region
        $region25: #{tpu_custom_call.1} parent=23 // pred_check
          %p155 = pneg %p36
        $region26: #{tpu_custom_call.1} parent=23 // pred_check_branch
          %157 = sbr.rel (%p155) target = $region28
        $region27: #{tpu_custom_call.1} parent=23 // pred_region
          %s158 = sand.u32 %s26, 1
          %s159 = scalar_lea.sflag [#allocation3], %s158
          %s160 = sand.u32 %s26, 1
          %s161 = smul.addr %s160, 4
          %s162 = scalar_lea.vmem [#allocation2], %s161
          %164 = vsyncadd %s159, 0
          %s165 = smul.addr %s16, 4
          %s166 = scalar_lea.hbm %s0, %s165
          %s168 = sshll.u32 %s166, 4
          %s169 = int_to_ptr.hbm [resolvable:$true] %s168
          %s170 = sshll.u32 %s162, 4
          %s171 = int_to_ptr.vmem [resolvable:$true] %s170
          %173 = dma.hbm_to_vmem [thread:$0]  %s169, 64, %s171, %s159
        $region28: #{tpu_custom_call.1} parent=23 // pred_fallthru
          _
      $region24: #{tpu_custom_call.1} parent=5 // pred_fallthru
        _
      %p174 = scmp.le.s32.totalorder 1, %s16
      %p175 = scmp.lt.s32.totalorder %s16, 3
      %p176 = pnand %p174, %p175
      %p177 = pneg %p176
      // Predicated region
      $region29: #{tpu_custom_call.1} parent=5 // pred_check
        _
      $region30: #{tpu_custom_call.1} parent=5 // pred_check_branch
        %179 = sbr.rel (%p176) target = $region32
      $region31: #{tpu_custom_call.1} parent=5 // pred_region
        %s180 = ssub.s32 %s16, 1
        %s181 = sand.u32 %s29, 1
        %s182 = scalar_lea.sflag [#allocation3], %s181
        %s183 = sand.u32 %s29, 1
        %s184 = smul.addr %s183, 4
        %s185 = scalar_lea.vmem [#allocation2], %s184
        // Predicated region
        $region33: #{tpu_custom_call.1} parent=31 // pred_check
          %p186 = pneg %p42
        $region34: #{tpu_custom_call.1} parent=31 // pred_check_branch
          %188 = sbr.rel (%p186) target = $region36
        $region35: #{tpu_custom_call.1} parent=31 // pred_region
          %190 = dma.done %s182, 64
        $region36: #{tpu_custom_call.1} parent=31 // pred_fallthru
          _
        // Predicated region
        $region37: #{tpu_custom_call.1} parent=31 // pred_check
          %p191 = pneg %p63
        $region38: #{tpu_custom_call.1} parent=31 // pred_check_branch
          %193 = sbr.rel (%p191) target = $region40
        $region39: #{tpu_custom_call.1} parent=31 // pred_region
          %195 = dma.done [#allocation6], 256
        $region40: #{tpu_custom_call.1} parent=31 // pred_fallthru
          _
        // Predicated region
        $region41: #{tpu_custom_call.1} parent=31 // pred_check
          %p196 = pneg %p84
        $region42: #{tpu_custom_call.1} parent=31 // pred_check_branch
          %198 = sbr.rel (%p196) target = $region44
        $region43: #{tpu_custom_call.1} parent=31 // pred_region
          %200 = dma.done [#allocation6], 64
        $region44: #{tpu_custom_call.1} parent=31 // pred_fallthru
          _
        %s201 = sand.u32 %s29, 1
        %s202 = scalar_lea.sflag [#allocation3], %s201
        %s203 = sand.u32 %s29, 1
        %s204 = smul.addr %s203, 4
        %s205 = scalar_lea.vmem [#allocation2], %s204
        %p206 = pneg %p42
        %p207 = pneg %p39
        %p208 = pneg %p63
        %p209 = pneg %p60
        %p210 = pneg %p84
        %p211 = pneg %p81
        %p212 = pneg %p110
        %p213 = pneg %p107
        %s214 = sand.u32 %s97, 1
        %s215 = scalar_lea.sflag [#allocation4], %s214
        %s216 = sand.u32 %s97, 1
        %s217 = smul.addr %s216, 8
        %s218 = scalar_lea.vmem [#allocation8], %s217
        %v220 = vld [vmem:[%s185] sm:$0xf]
        %v221 = vld [vmem:[#allocation5] sm:$0xf]
        %v222 = vld [vmem:[#allocation5 + $0x4] sm:$0xf]
        %v223 = vld [vmem:[#allocation5 + $0x8] sm:$0xf]
        %v224 = vld [vmem:[#allocation5 + $0xc] sm:$0xf]
        %v225 = vld [vmem:[#allocation7] sm:$0x1]
        %v226 = vperm.slane %v225, 0
        %v231 = vunpack.c.l.b16 %v221
        %v232 = vunpack.c.l.b16 %v222
        %v233 = vunpack.c.l.b16 %v223
        %v234 = vunpack.c.l.b16 %v224
        %v235 = vpack.c.b16 %v232, %v231
        %v236 = vpack.c.b16 %v234, %v233
        %vm239 = vcmask 261120
        %v241 = vsel %vm239, %v220, 0
        %243 = vmatpush.bf16.msra.mxu0 0
        %244 = vmatpush.bf16.msra.mxu0 0
        %245 = vmatpush.bf16.msra.mxu0 0
        %246 = vmatpush.bf16.msra.mxu0 0
        %247 = vmatpush.bf16.msra.mxu0 0
        %248 = vmatpush.bf16.msra.mxu0 0
        %249 = vmatpush.bf16.msra.mxu0 %v236
        %250 = vmatpush.bf16.msra.mxu0 %v235
        %251 = vmatmul.bf16.gmra.mxu0 %v241
        %v252 = vpop.f32.mrf.mxu0
        %v253 = vadd.f32 %v226, %v252
        %v254 = vpop.f32.mrf.mxu0
        %255 = vdwg.mxu0
        %vm256 = vcmask 523264
        %v257 = vsel %vm256, %v253, 0.0
        %258 = vadd.xlane.f32.xlu0 %v257
        %v259 = vpop.xlane.xlu0 %258
        %v260 = vrcp.pop 64.0
        %v261 = vmul.f32 64.0, %v260
        %v262 = vsub.f32 1.0, %v261
        %v263 = vmul.f32 %v260, %v262
        %v264 = vadd.f32 %v260, %v263
        %vm265 = vweird.f32 %v260
        %v266 = vsel %vm265, %v260, %v264
        %v267 = vmul.f32 %v259, %v266
        %v268 = vsub.f32 %v253, %v267
        %v269 = vmul.f32 %v268, %v268
        %v270 = vsel %vm256, %v269, 0.0
        %271 = vadd.xlane.f32.xlu0 %v270
        %v272 = vpop.xlane.xlu0 %271
        %v273 = vmul.f32 %v272, %v266
        %v274 = vadd.f32 %v273, 1e-05
        %v275 = vrsqrt.pop %v274
        %v276 = vmul.f32 %v275, %v274
        %v277 = vmul.f32 %v276, %v275
        %v278 = vmul.f32 0.5, %v277
        %v279 = vsub.f32 1.5, %v278
        %v280 = vmul.f32 %v275, %v279
        %vm281 = vweird.f32 %v274
        %vm282 = vweird.f32 %v275
        %vm283 = vmor %vm281, %vm282
        %v284 = vsel %vm283, %v275, %v280
        %v285 = vmul.f32 %v268, %v284
        %v286 = vld [vmem:[#allocation7 + $0x1] sm:$0x1]
        %v287 = vperm.slane %v286, 0
        %v288 = vmul.f32 %v285, %v287
        %v289 = vld [vmem:[#allocation7 + $0x2] sm:$0x1]
        %v290 = vperm.slane %v289, 0
        %v291 = vadd.f32 %v288, %v290
        %v292 = vmax.f32 %v291, 0.0
        %293 = vst.msk [vmem:[%s218] sm:$0xff] %vm256, %v292
        %s294 = sand.u32 %s97, 1
        %s295 = scalar_lea.sflag [#allocation4], %s294
        %s296 = sand.u32 %s97, 1
        %s297 = smul.addr %s296, 8
        %s298 = scalar_lea.vmem [#allocation8], %s297
        // Predicated region
        $region45: #{tpu_custom_call.1} parent=31 // pred_check
          %p299 = pneg %p107
        $region46: #{tpu_custom_call.1} parent=31 // pred_check_branch
          %301 = sbr.rel (%p299) target = $region48
        $region47: #{tpu_custom_call.1} parent=31 // pred_region
          %303 = vsyncadd %s295, 0
          %s304 = smul.addr %s21, 8
          %s305 = scalar_lea.hbm %s3, %s304
          %s307 = sshll.u32 %s298, 4
          %s308 = int_to_ptr.vmem [resolvable:$true] %s307
          %s309 = sshll.u32 %s305, 4
          %s310 = int_to_ptr.hbm [resolvable:$true] %s309
          %312 = dma.vmem_to_hbm [thread:$0]  %s308, 128, %s310, %s295
        $region48: #{tpu_custom_call.1} parent=31 // pred_fallthru
          _
      $region32: #{tpu_custom_call.1} parent=5 // pred_fallthru
        _
      %p313 = scmp.le.s32.totalorder 2, %s16
      // Predicated region
      $region49: #{tpu_custom_call.1} parent=5 // pred_check
        %p314 = pneg %p313
      $region50: #{tpu_custom_call.1} parent=5 // pred_check_branch
        %316 = sbr.rel (%p314) target = $region52
      $region51: #{tpu_custom_call.1} parent=5 // pred_region
        %s317 = ssub.s32 %s16, 2
        // Predicated region
        $region53: #{tpu_custom_call.1} parent=51 // pred_check
          %p318 = pneg %p113
        $region54: #{tpu_custom_call.1} parent=51 // pred_check_branch
          %320 = sbr.rel (%p318) target = $region56
        $region55: #{tpu_custom_call.1} parent=51 // pred_region
          %s321 = sand.u32 %s98, 1
          %s322 = scalar_lea.sflag [#allocation4], %s321
          %s323 = sand.u32 %s98, 1
          %s324 = smul.addr %s323, 8
          %s325 = scalar_lea.vmem [#allocation8], %s324
          %327 = dma.done %s322, 128
        $region56: #{tpu_custom_call.1} parent=51 // pred_fallthru
          _
      $region52: #{tpu_custom_call.1} parent=5 // pred_fallthru
        _
    $region6: #{tpu_custom_call.1} parent=1 // loop_footer
      %s20 = sadd.s32 1, %s16
    $region7: #{tpu_custom_call.1} parent=1 // loop_footer_branch
      %15 = sbr.rel target = $region3
    $region8: #{tpu_custom_call.1} parent=1 // loop_exit
      _
    %328 = vsyncpa [#allocation3], 1
    %s329 = scalar_lea.sflag [#allocation3], 1
    %330 = vsyncpa %s329, 1
    %331 = vsyncpa [#allocation6], 1
    %332 = vsyncpa [#allocation4], 1
    %s333 = scalar_lea.sflag [#allocation4], 1
    %334 = vsyncpa %s333, 1

</llo_original>
